<compile_context>
chip_gen: v5e
topology: v5e:2x2
jax: 0.10.0
libtpu: 0.0.40
codegen_flags: <defaults>
</compile_context>

<pallas_src>
import functools

import jax
import jax.numpy as jnp
from jax.experimental import pallas as pl
from jax.experimental.pallas import tpu as pltpu


def _gem_kernel(x_ref, o_ref, *, p, eps, inv_hw):
    # x_ref: (tile_rows, H*W), o_ref: (tile_rows, 1)
    x = x_ref[...].astype(jnp.float32)
    x = jnp.maximum(x, eps)  # clamp(min=eps)  ->  x > 0 guaranteed

    p = float(p)
    p_int = int(round(p))
    if p == float(p_int) and 1 <= p_int <= 8:
        # Small-integer power via VPU multiplies (default p=3 -> x*x*x).
        xp = x
        for _ in range(p_int - 1):
            xp = xp * x
    else:
        # General positive-base power via EUP exp/log.
        xp = jnp.exp(p * jnp.log(x))

    mean = jnp.sum(xp, axis=-1, keepdims=True) * inv_hw
    # mean ** (1/p): only one value per row, so exp/log here is cheap.
    out = jnp.exp((1.0 / p) * jnp.log(mean))
    o_ref[...] = out.astype(o_ref.dtype)


def gem_pallas(x, p=3.0, eps=1e-6):
    """GeM pooling. x: (N, C, H, W) float -> (N, C, 1, 1) same dtype."""
    N, C, H, W = x.shape
    rows = N * C
    hw = H * W
    x2 = x.reshape(rows, hw)

    itemsize = jnp.dtype(x.dtype).itemsize

    # Pick a row tile so the input block is ~2 MiB (double-buffered ~4 MiB of
    # VMEM), a multiple of 8 sublanes, capped at 4096 rows.
    tile_rows = (2 * 1024 * 1024) // max(1, hw * itemsize)
    tile_rows = max(8, min(4096, (tile_rows // 8) * 8))
    rows_min = ((rows + 7) // 8) * 8          # smallest legal padded row count
    tile_rows = min(tile_rows, rows_min)      # don't over-tile tiny inputs

    num_tiles = -(-rows // tile_rows)         # ceil div
    rows_padded = num_tiles * tile_rows

    if rows_padded != rows:
        # Padding rows are benign (clamped then pooled, sliced away below).
        x2 = jnp.pad(x2, ((0, rows_padded - rows), (0, 0)), constant_values=1.0)

    kernel = functools.partial(
        _gem_kernel, p=float(p), eps=float(eps), inv_hw=1.0 / float(hw)
    )

    p_is_int = float(p) == float(int(round(float(p)))) and 1 <= int(round(float(p))) <= 8
    transcendentals = 2 * rows_padded if p_is_int else 2 * rows_padded * hw + 2 * rows_padded
    cost = pl.CostEstimate(
        flops=3 * rows_padded * hw,
        transcendentals=transcendentals,
        bytes_accessed=rows_padded * hw * itemsize + rows_padded * itemsize,
    )

    out = pl.pallas_call(
        kernel,
        out_shape=jax.ShapeDtypeStruct((rows_padded, 1), x.dtype),
        grid_spec=pltpu.PrefetchScalarGridSpec(
            num_scalar_prefetch=0,
            grid=(num_tiles,),
            in_specs=[pl.BlockSpec((tile_rows, hw), lambda i: (i, 0))],
            out_specs=pl.BlockSpec((tile_rows, 1), lambda i: (i, 0)),
        ),
        compiler_params=pltpu.CompilerParams(
            dimension_semantics=("parallel",),
        ),
        cost_estimate=cost,
    )(x2)

    return out[:rows].reshape(N, C, 1, 1)


def gem_reference(x, p=3.0, eps=1e-6):
    xc = jnp.maximum(x, eps)
    pooled = jnp.mean(xc ** p, axis=(-2, -1), keepdims=True)
    return pooled ** (1.0 / p)


if __name__ == "__main__":
    key = jax.random.PRNGKey(0)

    # Primary case: small NCHW shapes consistent with the module's forward.
    N, C, H, W = 2, 4, 16, 16
    x = jax.random.normal(key, (N, C, H, W), dtype=jnp.float32)

    p = 3.0   # GeM default (p_trainable=False -> plain scalar 3)
    eps = 1e-6

    out = gem_pallas(x, p=p, eps=eps)
    out = jax.block_until_ready(out)

    ref = gem_reference(x, p=p, eps=eps)
    assert out.shape == (N, C, 1, 1), out.shape
    assert jnp.allclose(out, ref, atol=1e-5, rtol=1e-5), (
        f"max abs err = {jnp.max(jnp.abs(out - ref))}"
    )

    # Secondary case: rows (N*C) not a multiple of 8 and small H*W (7x7),
    # exercising the padding path and the non-128-multiple spatial width.
    key2 = jax.random.PRNGKey(1)
    x2 = jax.random.normal(key2, (2, 3, 7, 7), dtype=jnp.float32)
    out2 = jax.block_until_ready(gem_pallas(x2, p=p, eps=eps))
    ref2 = gem_reference(x2, p=p, eps=eps)
    assert out2.shape == (2, 3, 1, 1), out2.shape
    assert jnp.allclose(out2, ref2, atol=1e-5, rtol=1e-5), (
        f"max abs err = {jnp.max(jnp.abs(out2 - ref2))}"
    )

    print("KERNEL_OK")
</pallas_src>

<mosaic_0001>
module attributes {stable_mosaic.version = 11 : i64} {
  func.func @_gem_kernel(%arg0: i32, %arg1: memref<8x256xf32, #tpu.memory_space<vmem>>, %arg2: memref<8x1xf32, #tpu.memory_space<vmem>>) attributes {dimension_semantics = [#tpu.dimension_semantics<parallel>], iteration_bounds = array<i64: 1>, scalar_prefetch = 0 : i64, scratch_operands = 0 : i64, tpu.core_type = #tpu.core_type<tc>, window_params = [{transform_indices = @transform_0, window_bounds = array<i64: 8, 256>}, {transform_indices = @transform_1, window_bounds = array<i64: 8, 1>}]} {
    %c0 = arith.constant 0 : index
    %c0_0 = arith.constant 0 : index
    %0 = vector.load %arg1[%c0, %c0_0] : memref<8x256xf32, #tpu.memory_space<vmem>>, vector<8x256xf32>
    %cst = arith.constant 9.99999997E-7 : f32
    %1 = vector.broadcast %cst : f32 to vector<8x256xf32>
    %2 = arith.maximumf %0, %1 : vector<8x256xf32>
    %3 = arith.mulf %2, %2 : vector<8x256xf32>
    %4 = arith.mulf %3, %2 : vector<8x256xf32>
    %cst_1 = arith.constant dense<0.000000e+00> : vector<8xf32>
    %5 = vector.multi_reduction <add>, %4, %cst_1 [1] : vector<8x256xf32> to vector<8xf32>
    %6 = vector.shape_cast %5 : vector<8xf32> to vector<8x1xf32>
    %cst_2 = arith.constant 3.906250e-03 : f32
    %7 = vector.broadcast %cst_2 : f32 to vector<8x1xf32>
    %8 = arith.mulf %6, %7 : vector<8x1xf32>
    %9 = math.log %8 : vector<8x1xf32>
    %cst_3 = arith.constant 0.333333343 : f32
    %10 = vector.broadcast %cst_3 : f32 to vector<8x1xf32>
    %11 = arith.mulf %10, %9 : vector<8x1xf32>
    %12 = math.exp %11 : vector<8x1xf32>
    %c0_4 = arith.constant 0 : index
    %c0_5 = arith.constant 0 : index
    %13 = vector.load %arg2[%c0_4, %c0_5] : memref<8x1xf32, #tpu.memory_space<vmem>>, vector<8x1xf32>
    tpu.vector_store %arg2[%c0_4, %c0_5], %12 {strides = array<i32>} : memref<8x1xf32, #tpu.memory_space<vmem>>, vector<8x1xf32>,
    return
  }
  func.func @transform_0(%arg0: i32) -> (i32, i32) {
    %c0_i32 = arith.constant 0 : i32
    %c0_i32_0 = arith.constant 0 : i32
    return %arg0, %c0_i32 : i32, i32
  }
  func.func @transform_1(%arg0: i32) -> (i32, i32) {
    %c0_i32 = arith.constant 0 : i32
    %c0_i32_0 = arith.constant 0 : i32
    return %arg0, %c0_i32 : i32, i32
  }
}

</mosaic_0001>

<llo_original>
// kernel: tpu_custom_call.1
$region0: #{tpu_custom_call.1}
  #allocation0 [shape = 'u32[]', space=smem, size = 0x4, offset = 0x4, fixed_abs, tag = 'smem constant byte address 0x4 - core index']
  #allocation1 [shape = 'u32[72,128]{1,0:T(1,128)}', space=vmem, size = 0x9000, scoped, tag = 'internal scratch']
  %s0 = inlined_call_operand.hbm [shape: f32[8,256], index: 0, kind: input, shape index: {}]
  %s1 = inlined_call_operand.vmem [shape: f32[8,1], index: 1, kind: output, shape index: {}]
  %s2 = sld [smem:[#allocation0]]
  $region18: #{tpu_custom_call.1} parent=0
    _
  %s4 = ssub.s32 1, %s2
  %s5 = scalar_select 0, %s4, %s2
  $region1: #{tpu_custom_call.1} parent=0
    #allocation2 [shape = 'u8[8192]{0}', space=vmem, size = 0x2000, scoped, tag = 'input window, operand 0, single buffered']
    #allocation3 [shape = 's32[1]{0}', space=sflag, size = 0x4, scoped, tag = 'scoped memory for tpu_custom_call.1']
    %6 = vsyncpa [#allocation3], 0
    // Predicated region
    $region2: #{tpu_custom_call.1} parent=1 // pred_check
      _
    $region3: #{tpu_custom_call.1} parent=1 // pred_check_branch
      %8 = sbr.rel (0) target = $region5
    $region4: #{tpu_custom_call.1} parent=1 // pred_region
      %10 = vsyncadd [#allocation3], 0
      %s12 = sshll.u32 %s0, 4
      %s13 = int_to_ptr.hbm [resolvable:$true] %s12
      %s14 = sshll.u32 [#allocation2], 4
      %s15 = int_to_ptr.vmem [resolvable:$true] %s14
      %17 = dma.hbm_to_vmem [thread:$0]  %s13, 256, %s15, [#allocation3]
    $region5: #{tpu_custom_call.1} parent=1 // pred_fallthru
      _
    // Predicated region
    $region6: #{tpu_custom_call.1} parent=1 // pred_check
      _
    $region7: #{tpu_custom_call.1} parent=1 // pred_check_branch
      %19 = sbr.rel (0) target = $region9
    $region8: #{tpu_custom_call.1} parent=1 // pred_region
      %21 = dma.done [#allocation3], 256
    $region9: #{tpu_custom_call.1} parent=1 // pred_fallthru
      _
    %v22 = vld [vmem:[#allocation2] sm:$0xff]
    %v23 = vld [vmem:[#allocation2 + $0x8] sm:$0xff]
    %v24 = vmax.f32 %v22, 1e-06
    %v25 = vmax.f32 %v23, 1e-06
    %v26 = vmul.f32 %v24, %v24
    %v27 = vmul.f32 %v25, %v25
    %v28 = vmul.f32 %v26, %v24
    %v29 = vmul.f32 %v27, %v25
    %v30 = vadd.f32 %v28, %v29
    %31 = vadd.xlane.f32.xlu0 %v30
    %v32 = vpop.xlane.xlu0 %31
    %v33 = vmul.f32 %v32, 0.00390625
    %v34 = vlog2.pop %v33
    %v35 = vmul.f32 %v34, 0.6931472
    %v36 = vmul.f32 %v35, 0.33333334
    %v37 = vmul.f32 %v36, 1.442695
    %v38 = vpow.pop %v37
    %vm39 = vcmask 7168
    %40 = vst.msk [vmem:[%s1] sm:$0xff] %vm39, %v38
    // Predicated region
    $region10: #{tpu_custom_call.1} parent=1 // pred_check
      _
    $region11: #{tpu_custom_call.1} parent=1 // pred_check_branch
      %42 = sbr.rel (0) target = $region13
    $region12: #{tpu_custom_call.1} parent=1 // pred_region
      _
    $region13: #{tpu_custom_call.1} parent=1 // pred_fallthru
      _
    // Predicated region
    $region14: #{tpu_custom_call.1} parent=1 // pred_check
      _
    $region15: #{tpu_custom_call.1} parent=1 // pred_check_branch
      %44 = sbr.rel (0) target = $region17
    $region16: #{tpu_custom_call.1} parent=1 // pred_region
      _
    $region17: #{tpu_custom_call.1} parent=1 // pred_fallthru
      _
    %45 = vsyncpa [#allocation3], 1

</llo_original>
